<compile_context>
chip_gen: v5e
topology: v5e:2x2
jax: 0.10.0
libtpu: 0.0.40
codegen_flags: <defaults>
</compile_context>

<pallas_src>
import jax
import jax.numpy as jnp
from jax.experimental import pallas as pl
from jax.experimental.pallas import tpu as pltpu


def _ceil_to(a, b):
    return -(-a // b) * b


def _sublane_multiple(dtype):
    bits = jnp.dtype(dtype).itemsize * 8
    return max(8, 256 // bits)  # 8 for 32-bit, 16 for bf16, 32 for int8/fp8


def _make_kernel(Chans, lateral, central, hemichan, first_left):
    contig_slot = 0 if first_left else 1
    gather_slot = 1 - contig_slot

    def kernel(x_ref, o_ref):
        # x_ref: (TB, Chans, TS)   o_ref: (TB, 2, hemichan, TS)

        # Contiguous hemisphere: single slab store.
        o_ref[:, contig_slot, :, :] = x_ref[:, :hemichan, :]

        # Mirrored hemisphere: reversed lateral rows + shared central slab,
        # assembled into one array (XLU sublane shuffles) and written with a
        # single slab store instead of `lateral` masked single-row stores.
        parts = []
        for c in range(lateral):
            src = Chans - 1 - c
            parts.append(x_ref[:, src:src + 1, :])
        if central > 0:
            parts.append(x_ref[:, lateral:hemichan, :])
        right = parts[0] if len(parts) == 1 else jnp.concatenate(parts, axis=1)
        o_ref[:, gather_slot, :, :] = right

    return kernel


def eegsym_input(x, Chans=8, lateral_chans=3, first_left=True, batch_block=None):
    """Pallas implementation of EEGSymInput.forward.

    x: (N, Chans, Samples) -> (N, 1, 2, hemichan, Samples)
    """
    N, C, S = x.shape
    assert C == Chans, (C, Chans)
    lateral = lateral_chans
    central = Chans - 2 * lateral
    assert central >= 0, "Chans must be >= 2 * lateral_chans"
    hemichan = lateral + central
    assert hemichan > 0

    itemsize = jnp.dtype(x.dtype).itemsize
    sub = _sublane_multiple(x.dtype)

    # --- Sample (lane) tiling: bound per-block VMEM independent of S. ---
    if S > 1024:
        ts = 512                       # multiple of 128 -> dense lanes
    else:
        ts = S                         # full extent (allowed even if not %128)
    ns = pl.cdiv(S, ts)

    # --- Accurate padded VMEM footprint per batch sample per sample tile. ---
    lanes = _ceil_to(ts, 128)
    in_bytes = _ceil_to(Chans, sub) * lanes * itemsize
    out_bytes = 2 * _ceil_to(hemichan, sub) * lanes * itemsize
    per_sample = 2 * (in_bytes + out_bytes)      # x2: double-buffered in + out

    TARGET_BLOCK_BYTES = 2 << 20     # ~2 MiB blocks already sit at HBM roofline
    MAX_BLOCK_BYTES = 24 << 20       # hard cap (leaves headroom on v7x / v5e)
    tb_cap = max(1, MAX_BLOCK_BYTES // per_sample)

    if batch_block is None:
        tb = max(1, min(N, TARGET_BLOCK_BYTES // per_sample))
        # Prefer >= 8 total grid steps so prefetch / writeback overlap ramps up.
        if ns * pl.cdiv(N, tb) < 8:
            want_nb = -(-8 // ns)                 # ceil(8 / ns)
            if N >= want_nb:
                tb = min(tb, N // want_nb)
        # Keep >= 2 batch blocks when possible (both v7x TensorCores get work).
        if N >= 2:
            tb = min(tb, pl.cdiv(N, 2))
    else:
        tb = max(1, min(batch_block, N))
    tb = max(1, min(tb, tb_cap))
    nb = pl.cdiv(N, tb)

    footprint = tb * per_sample
    vmem_limit = int(min(max(footprint + (4 << 20), 16 << 20), 32 << 20))

    bytes_accessed = (N * Chans * S + N * 2 * hemichan * S) * itemsize
    cost = pl.CostEstimate(
        flops=0, transcendentals=0, bytes_accessed=int(bytes_accessed)
    )

    kernel = _make_kernel(Chans, lateral, central, hemichan, first_left)

    out = pl.pallas_call(
        kernel,
        out_shape=jax.ShapeDtypeStruct((N, 2, hemichan, S), x.dtype),
        grid_spec=pltpu.PrefetchScalarGridSpec(
            num_scalar_prefetch=0,
            grid=(nb, ns),
            in_specs=[
                pl.BlockSpec((tb, Chans, ts), lambda b, s: (b, 0, s)),
            ],
            out_specs=pl.BlockSpec(
                (tb, 2, hemichan, ts), lambda b, s: (b, 0, 0, s)
            ),
        ),
        compiler_params=pltpu.CompilerParams(
            dimension_semantics=("parallel", "parallel"),
            vmem_limit_bytes=vmem_limit,
        ),
        cost_estimate=cost,
    )(x)

    # Free reshape for the first unsqueeze(1): (N, 1, 2, hemichan, S)
    return out.reshape(N, 1, 2, hemichan, S)


def eegsym_input_ref(x, Chans=8, lateral_chans=3, first_left=True):
    """Pure-JAX reference mirroring the PyTorch forward exactly."""
    lateral = lateral_chans
    central = Chans - lateral * 2
    hemichan = lateral + central
    right_shuffle = [-i for i in range(1, hemichan - central + 1)] + [
        i for i in range(hemichan - central, hemichan)
    ]
    x5 = x[:, None, None, :, :]  # (N,1,1,C,S)
    left = x5[..., :hemichan, :]
    right = jnp.take(x5, jnp.array([i % Chans for i in right_shuffle]), axis=-2)
    if not first_left:
        left, right = right, left
    return jnp.concatenate((left, right), axis=2)  # (N,1,2,hemichan,S)


if __name__ == "__main__":
    key = jax.random.PRNGKey(0)
    k1, k2, k3 = jax.random.split(key, 3)

    # Case 1: default config (Chans=8, lateral=3), lane-dense samples (S = 128).
    N, Chans, S = 4, 8, 128
    x1 = jax.random.normal(k1, (N, Chans, S), dtype=jnp.float32)
    out1 = jax.block_until_ready(
        eegsym_input(x1, Chans=Chans, lateral_chans=3, first_left=True)
    )
    ref1 = eegsym_input_ref(x1, Chans=Chans, lateral_chans=3, first_left=True)
    assert out1.shape == ref1.shape, (out1.shape, ref1.shape)
    assert jnp.array_equal(out1, ref1), "mismatch (first_left=True)"

    # Case 2: no central channels, swapped hemispheres, ragged batch / non-128 S.
    N2, Chans2, S2 = 3, 6, 96
    x2 = jax.random.normal(k2, (N2, Chans2, S2), dtype=jnp.float32)
    out2 = jax.block_until_ready(
        eegsym_input(x2, Chans=Chans2, lateral_chans=3, first_left=False)
    )
    ref2 = eegsym_input_ref(x2, Chans=Chans2, lateral_chans=3, first_left=False)
    assert out2.shape == ref2.shape, (out2.shape, ref2.shape)
    assert jnp.array_equal(out2, ref2), "mismatch (first_left=False)"

    # Case 3: long recording -> exercises the sample-tiled 2-D grid path.
    N3, Chans3, S3 = 2, 8, 1536
    x3 = jax.random.normal(k3, (N3, Chans3, S3), dtype=jnp.float32)
    out3 = jax.block_until_ready(
        eegsym_input(x3, Chans=Chans3, lateral_chans=3, first_left=True)
    )
    ref3 = eegsym_input_ref(x3, Chans=Chans3, lateral_chans=3, first_left=True)
    assert out3.shape == ref3.shape, (out3.shape, ref3.shape)
    assert jnp.array_equal(out3, ref3), "mismatch (sample-tiled path)"

    print("KERNEL_OK")
</pallas_src>

<mosaic_0001>
module attributes {stable_mosaic.version = 11 : i64} {
  func.func @kernel(%arg0: i32, %arg1: i32, %arg2: memref<2x8x128xf32, #tpu.memory_space<vmem>>, %arg3: memref<2x2x5x128xf32, #tpu.memory_space<vmem>>) attributes {dimension_semantics = [#tpu.dimension_semantics<parallel>, #tpu.dimension_semantics<parallel>], iteration_bounds = array<i64: 2, 1>, scalar_prefetch = 0 : i64, scratch_operands = 0 : i64, tpu.core_type = #tpu.core_type<tc>, window_params = [{transform_indices = @transform_0, window_bounds = array<i64: 2, 8, 128>}, {transform_indices = @transform_1, window_bounds = array<i64: 2, 2, 5, 128>}]} {
    %c0 = arith.constant 0 : index
    %c0_0 = arith.constant 0 : index
    %c0_1 = arith.constant 0 : index
    %0 = vector.load %arg2[%c0, %c0_0, %c0_1] : memref<2x8x128xf32, #tpu.memory_space<vmem>>, vector<2x5x128xf32>
    %c0_2 = arith.constant 0 : index
    %c0_3 = arith.constant 0 : index
    %c0_4 = arith.constant 0 : index
    %c0_5 = arith.constant 0 : index
    %1 = vector.load %arg3[%c0_2, %c0_3, %c0_4, %c0_5] : memref<2x2x5x128xf32, #tpu.memory_space<vmem>>, vector<2x1x5x128xf32>
    %2 = vector.shape_cast %1 : vector<2x1x5x128xf32> to vector<2x5x128xf32>
    %3 = vector.shape_cast %0 : vector<2x5x128xf32> to vector<2x1x5x128xf32>
    tpu.vector_store %arg3[%c0_2, %c0_3, %c0_4, %c0_5], %3 {strides = array<i32>} : memref<2x2x5x128xf32, #tpu.memory_space<vmem>>, vector<2x1x5x128xf32>,
    %c0_6 = arith.constant 0 : index
    %c7 = arith.constant 7 : index
    %c0_7 = arith.constant 0 : index
    %4 = vector.load %arg2[%c0_6, %c7, %c0_7] : memref<2x8x128xf32, #tpu.memory_space<vmem>>, vector<2x1x128xf32>
    %c0_8 = arith.constant 0 : index
    %c6 = arith.constant 6 : index
    %c0_9 = arith.constant 0 : index
    %5 = vector.load %arg2[%c0_8, %c6, %c0_9] : memref<2x8x128xf32, #tpu.memory_space<vmem>>, vector<2x1x128xf32>
    %c0_10 = arith.constant 0 : index
    %c5 = arith.constant 5 : index
    %c0_11 = arith.constant 0 : index
    %6 = vector.load %arg2[%c0_10, %c5, %c0_11] : memref<2x8x128xf32, #tpu.memory_space<vmem>>, vector<2x1x128xf32>
    %c0_12 = arith.constant 0 : index
    %c3 = arith.constant 3 : index
    %c0_13 = arith.constant 0 : index
    %7 = vector.load %arg2[%c0_12, %c3, %c0_13] : memref<2x8x128xf32, #tpu.memory_space<vmem>>, vector<2x2x128xf32>
    %8 = tpu.concatenate %4, %5, %6, %7 in 1 : vector<2x1x128xf32>, vector<2x1x128xf32>, vector<2x1x128xf32>, vector<2x2x128xf32> -> vector<2x5x128xf32>
    %c0_14 = arith.constant 0 : index
    %c1 = arith.constant 1 : index
    %c0_15 = arith.constant 0 : index
    %c0_16 = arith.constant 0 : index
    %9 = vector.load %arg3[%c0_14, %c1, %c0_15, %c0_16] : memref<2x2x5x128xf32, #tpu.memory_space<vmem>>, vector<2x1x5x128xf32>
    %10 = vector.shape_cast %9 : vector<2x1x5x128xf32> to vector<2x5x128xf32>
    %11 = vector.shape_cast %8 : vector<2x5x128xf32> to vector<2x1x5x128xf32>
    tpu.vector_store %arg3[%c0_14, %c1, %c0_15, %c0_16], %11 {strides = array<i32>} : memref<2x2x5x128xf32, #tpu.memory_space<vmem>>, vector<2x1x5x128xf32>,
    return
  }
  func.func @transform_0(%arg0: i32, %arg1: i32) -> (i32, i32, i32) {
    %c0_i32 = arith.constant 0 : i32
    %c0_i32_0 = arith.constant 0 : i32
    return %arg0, %c0_i32, %arg1 : i32, i32, i32
  }
  func.func @transform_1(%arg0: i32, %arg1: i32) -> (i32, i32, i32, i32) {
    %c0_i32 = arith.constant 0 : i32
    %c0_i32_0 = arith.constant 0 : i32
    %c0_i32_1 = arith.constant 0 : i32
    return %arg0, %c0_i32, %c0_i32_0, %arg1 : i32, i32, i32, i32
  }
}

</mosaic_0001>

<llo_original>
// kernel: tpu_custom_call.1
$region0: #{tpu_custom_call.1}
  #allocation0 [shape = 'u32[]', space=smem, size = 0x4, offset = 0x4, fixed_abs, tag = 'smem constant byte address 0x4 - core index']
  #allocation1 [shape = 'u32[72,128]{1,0:T(1,128)}', space=vmem, size = 0x9000, scoped, tag = 'internal scratch']
  %s0 = inlined_call_operand.hbm [shape: f32[4,8,128], index: 0, kind: input, shape index: {}]
  %s1 = inlined_call_operand.vmem [shape: f32[4,2,5,128], index: 1, kind: output, shape index: {}]
  %s2 = sld [smem:[#allocation0]]
  $region41: #{tpu_custom_call.1} parent=0
    _
  %s4 = ssub.s32 1, %s2
  %s5 = scalar_select 0, %s4, %s2
  $region1: #{tpu_custom_call.1} parent=0
    #allocation2 [shape = 'u8[16384]{0}', space=vmem, size = 0x4000, scoped, tag = 'input window, operand 0']
    #allocation3 [shape = 's32[2]{0}', space=sflag, size = 0x8, scoped, tag = 'scoped memory for tpu_custom_call.1']
    %6 = vsyncpa [#allocation3], 0
    %s7 = scalar_lea.sflag [#allocation3], 1
    %8 = vsyncpa %s7, 0
    loop: start=0, step=1, limit=4
    $region2: #{tpu_custom_call.1} parent=1 // loop_pre_header
      _
    $region3: #{tpu_custom_call.1} parent=1 // loop_header
      %s10 = sphi 0, %s14
      %p11 = scmp.ge.s32.totalorder %s10, 4
      %s17 = sphi 0, %s29
      %s18 = sphi 0, %s25
      %s19 = sphi 0, %s17
      %s20 = sphi 0, %s18
      %s21 = sphi 0, %s19
      %s22 = sphi 0, %s20
      %s34 = sphi 0, %s36
      %s37 = sphi 0, %s34
      %s38 = sphi 0, %s37
      %s54 = sphi 0, %s38
      %s62 = sphi 0, %s64
      %s65 = sphi 0, %s62
      %s66 = sphi 0, %s65
      %s82 = sphi 0, %s66
    $region4: #{tpu_custom_call.1} parent=1 // loop_header_branch
      %13 = sbr.rel (%p11) target = $region8
    $region5: #{tpu_custom_call.1} parent=1 // loop_body
      %s15 = ssub.s32 %s10, 1
      %s16 = ssub.s32 %s10, 2
      %s23 = sadd.s32 1, %s18
      %p24 = scmp.ge.s32.totalorder %s23, 1
      %s25 = scalar_select %p24, 0, %s23
      %s26 = sadd.s32 1, %s17
      %s27 = scalar_select %p24, %s26, %s17
      %p28 = scmp.ge.s32.totalorder %s27, 2
      %s29 = scalar_select %p28, 0, %s27
      %s30 = ssub.s32 %s17, %s29
      %s31 = ssub.s32 %s18, %s25
      %s32 = sor.u32 %s30, %s31
      %p33 = scmp.eq.s32.totalorder %s32, 0
      %s35 = sadd.s32 %s34, 1
      %s36 = scalar_select %p33, %s34, %s35
      %p39 = pneg %p33
      %p40 = scmp.eq.s32.totalorder %s10, 1
      %p41 = por %p39, %p40
      %p42 = scmp.ne.s32.totalorder %s34, %s37
      %p43 = scmp.eq.s32.totalorder %s10, 0
      %p44 = por %p42, %p43
      %p45 = scmp.ne.s32.totalorder %s34, %s37
      %p46 = scmp.eq.s32.totalorder %s15, 1
      %p47 = por %p45, %p46
      %p48 = scmp.ne.s32.totalorder %s37, %s38
      %p49 = scmp.eq.s32.totalorder %s15, 0
      %p50 = por %p48, %p49
      %p51 = scmp.ne.s32.totalorder %s37, %s38
      %p52 = scmp.eq.s32.totalorder %s16, 1
      %p53 = por %p51, %p52
      %p55 = scmp.ne.s32.totalorder %s38, %s54
      %p56 = scmp.eq.s32.totalorder %s16, 0
      %p57 = por %p55, %p56
      %s58 = ssub.s32 %s17, %s29
      %s59 = ssub.s32 %s18, %s25
      %s60 = sor.u32 %s58, %s59
      %p61 = scmp.eq.s32.totalorder %s60, 0
      %s63 = sadd.s32 %s62, 1
      %s64 = scalar_select %p61, %s62, %s63
      %p67 = pneg %p61
      %p68 = scmp.eq.s32.totalorder %s10, 1
      %p69 = por %p67, %p68
      %p70 = scmp.ne.s32.totalorder %s62, %s65
      %p71 = scmp.eq.s32.totalorder %s10, 0
      %p72 = por %p70, %p71
      %p73 = scmp.ne.s32.totalorder %s62, %s65
      %p74 = scmp.eq.s32.totalorder %s15, 1
      %p75 = por %p73, %p74
      %p76 = scmp.ne.s32.totalorder %s65, %s66
      %p77 = scmp.eq.s32.totalorder %s15, 0
      %p78 = por %p76, %p77
      %p79 = scmp.ne.s32.totalorder %s65, %s66
      %p80 = scmp.eq.s32.totalorder %s16, 1
      %p81 = por %p79, %p80
      %p83 = scmp.ne.s32.totalorder %s66, %s82
      %p84 = scmp.eq.s32.totalorder %s16, 0
      %p85 = por %p83, %p84
      %p86 = scmp.le.s32.totalorder 1, %s10
      %p87 = scmp.lt.s32.totalorder %s10, 3
      %p88 = pnand %p86, %p87
      %p89 = pneg %p88
      // Predicated region
      $region9: #{tpu_custom_call.1} parent=5 // pred_check
        _
      $region10: #{tpu_custom_call.1} parent=5 // pred_check_branch
        %91 = sbr.rel (%p88) target = $region12
      $region11: #{tpu_custom_call.1} parent=5 // pred_region
        %s92 = ssub.s32 %s10, 1
      $region12: #{tpu_custom_call.1} parent=5 // pred_fallthru
        _
      %p93 = scmp.lt.s32.totalorder %s10, 2
      // Predicated region
      $region13: #{tpu_custom_call.1} parent=5 // pred_check
        %p94 = pneg %p93
      $region14: #{tpu_custom_call.1} parent=5 // pred_check_branch
        %96 = sbr.rel (%p94) target = $region16
      $region15: #{tpu_custom_call.1} parent=5 // pred_region
        // Predicated region
        $region17: #{tpu_custom_call.1} parent=15 // pred_check
          %p97 = pneg %p44
        $region18: #{tpu_custom_call.1} parent=15 // pred_check_branch
          %99 = sbr.rel (%p97) target = $region20
        $region19: #{tpu_custom_call.1} parent=15 // pred_region
          %s100 = sand.u32 %s34, 1
          %s101 = scalar_lea.sflag [#allocation3], %s100
          %s102 = sand.u32 %s34, 1
          %s103 = smul.addr %s102, 16
          %s104 = scalar_lea.vmem [#allocation2], %s103
          %s105 = smul.u32 2, %s17
          %107 = vsyncadd %s101, 0
          %s108 = sadd.s32 %s18, %s105
          %s109 = smul.addr %s108, 8
          %s110 = scalar_lea.hbm %s0, %s109
          %s111 = sshll.u32 %s110, 4
          %s112 = int_to_ptr.hbm [resolvable:$true] %s111
          %s113 = sshll.u32 %s104, 4
          %s114 = int_to_ptr.vmem [resolvable:$true] %s113
          %119 = dma.hbm_to_vmem [thread:$0]  %s112, 256, %s114, %s101, 128, 128, 8
        $region20: #{tpu_custom_call.1} parent=15 // pred_fallthru
          _
      $region16: #{tpu_custom_call.1} parent=5 // pred_fallthru
        _
      %p120 = scmp.le.s32.totalorder 1, %s10
      %p121 = scmp.lt.s32.totalorder %s10, 3
      %p122 = pnand %p120, %p121
      %p123 = pneg %p122
      // Predicated region
      $region21: #{tpu_custom_call.1} parent=5 // pred_check
        _
      $region22: #{tpu_custom_call.1} parent=5 // pred_check_branch
        %125 = sbr.rel (%p122) target = $region24
      $region23: #{tpu_custom_call.1} parent=5 // pred_region
        %s126 = ssub.s32 %s10, 1
        %s127 = sand.u32 %s37, 1
        %s128 = scalar_lea.sflag [#allocation3], %s127
        %s129 = sand.u32 %s37, 1
        %s130 = smul.addr %s129, 16
        %s131 = scalar_lea.vmem [#allocation2], %s130
        // Predicated region
        $region25: #{tpu_custom_call.1} parent=23 // pred_check
          %p132 = pneg %p50
        $region26: #{tpu_custom_call.1} parent=23 // pred_check_branch
          %134 = sbr.rel (%p132) target = $region28
        $region27: #{tpu_custom_call.1} parent=23 // pred_region
          %136 = dma.done %s128, 256
        $region28: #{tpu_custom_call.1} parent=23 // pred_fallthru
          _
        %s137 = sand.u32 %s37, 1
        %s138 = scalar_lea.sflag [#allocation3], %s137
        %s139 = sand.u32 %s37, 1
        %s140 = smul.addr %s139, 16
        %s141 = scalar_lea.vmem [#allocation2], %s140
        %p142 = pneg %p50
        %p143 = pneg %p47
        %p144 = pneg %p78
        %p145 = pneg %p75
        %s146 = smul.u32 2, %s19
        %p147 = scmp.lt.s32.totalorder %s146, 3
        %s148 = scalar_select %p147, %s146, 3
        %p149 = scmp.lt.s32.totalorder %s20, 0
        %s150 = scalar_select %p149, %s20, 0
        %s151 = smul.addr %s148, 2
        %s152 = sadd.s32 %s150, %s151
        %s153 = smul.addr %s152, 8
        %s154 = scalar_lea.vmem %s1, %s153
        %s155 = smul.u32 2, %s19
        %s156 = smul.u32 2, %s19
        %p157 = scmp.lt.s32.totalorder %s156, 3
        %s158 = scalar_select %p157, %s156, 3
        %p159 = scmp.lt.s32.totalorder %s20, 0
        %s160 = scalar_select %p159, %s20, 0
        %s161 = smul.addr %s158, 2
        %s162 = sadd.s32 %s160, %s161
        %s163 = smul.addr %s162, 8
        %s164 = scalar_lea.vmem %s1, %s163
        %s165 = smul.u32 2, %s19
        %v166 = vld [vmem:[%s131] sm:$0x1f]
        %v167 = vld [vmem:[%s131 + $0x8] sm:$0x1f]
        %168 = vst [vmem:[%s164] sm:$0x1f] %v166
        %169 = vst [vmem:[%s164 + $0x10] sm:$0x1f] %v167
        %v170 = vld [vmem:[%s131 + $0x7] sm:$0x1]
        %v171 = vld [vmem:[%s131 + $0xf] sm:$0x1]
        %v172 = vld [vmem:[%s131 + $0x6] sm:$0x1]
        %v173 = vld [vmem:[%s131 + $0xe] sm:$0x1]
        %v174 = vld [vmem:[%s131 + $0x5] sm:$0x1]
        %v175 = vld [vmem:[%s131 + $0xd] sm:$0x1]
        %v176 = vld [vmem:[%s131 + $0x3] sm:$0x3]
        %v177 = vld [vmem:[%s131 + $0xb] sm:$0x3]
        %v180 = vrot.slane %v172, 7
        %v181 = vrot.slane %v173, 7
        %v186 = vrot.slane %v174, 6
        %v187 = vrot.slane %v175, 6
        %v192 = vrot.slane %v176, 5
        %v193 = vrot.slane %v177, 5
        %vm196 = vcmask 1040384
        %v197 = vsel %vm196, %v170, %v180
        %v198 = vsel %vm196, %v171, %v181
        %vm199 = vcmask 1041408
        %v200 = vsel %vm199, %v197, %v186
        %v201 = vsel %vm199, %v198, %v187
        %vm202 = vcmask 1042432
        %v203 = vsel %vm202, %v200, %v192
        %v204 = vsel %vm202, %v201, %v193
        %s205 = scalar_lea.vmem %s164, 8
        %206 = vst [vmem:[%s205] sm:$0x1f] %v203
        %207 = vst [vmem:[%s205 + $0x10] sm:$0x1f] %v204
        %s208 = smul.u32 2, %s19
        %p209 = scmp.lt.s32.totalorder %s208, 3
        %s210 = scalar_select %p209, %s208, 3
        %p211 = scmp.lt.s32.totalorder %s20, 0
        %s212 = scalar_select %p211, %s20, 0
        %s213 = smul.addr %s210, 2
        %s214 = sadd.s32 %s212, %s213
        %s215 = smul.addr %s214, 8
        %s216 = scalar_lea.vmem %s1, %s215
        // Predicated region
        $region29: #{tpu_custom_call.1} parent=23 // pred_check
          %p217 = pneg %p75
        $region30: #{tpu_custom_call.1} parent=23 // pred_check_branch
          %219 = sbr.rel (%p217) target = $region32
        $region31: #{tpu_custom_call.1} parent=23 // pred_region
          %s220 = smul.u32 2, %s19
        $region32: #{tpu_custom_call.1} parent=23 // pred_fallthru
          _
      $region24: #{tpu_custom_call.1} parent=5 // pred_fallthru
        _
      %p221 = scmp.le.s32.totalorder 2, %s10
      // Predicated region
      $region33: #{tpu_custom_call.1} parent=5 // pred_check
        %p222 = pneg %p221
      $region34: #{tpu_custom_call.1} parent=5 // pred_check_branch
        %224 = sbr.rel (%p222) target = $region36
      $region35: #{tpu_custom_call.1} parent=5 // pred_region
        %s225 = ssub.s32 %s10, 2
        // Predicated region
        $region37: #{tpu_custom_call.1} parent=35 // pred_check
          %p226 = pneg %p81
        $region38: #{tpu_custom_call.1} parent=35 // pred_check_branch
          %228 = sbr.rel (%p226) target = $region40
        $region39: #{tpu_custom_call.1} parent=35 // pred_region
          %s229 = smul.u32 2, %s21
          %p230 = scmp.lt.s32.totalorder %s229, 3
          %s231 = scalar_select %p230, %s229, 3
          %p232 = scmp.lt.s32.totalorder %s22, 0
          %s233 = scalar_select %p232, %s22, 0
          %s234 = smul.addr %s231, 2
          %s235 = sadd.s32 %s233, %s234
          %s236 = smul.addr %s235, 8
          %s237 = scalar_lea.vmem %s1, %s236
        $region40: #{tpu_custom_call.1} parent=35 // pred_fallthru
          _
      $region36: #{tpu_custom_call.1} parent=5 // pred_fallthru
        _
    $region6: #{tpu_custom_call.1} parent=1 // loop_footer
      %s14 = sadd.s32 1, %s10
    $region7: #{tpu_custom_call.1} parent=1 // loop_footer_branch
      %9 = sbr.rel target = $region3
    $region8: #{tpu_custom_call.1} parent=1 // loop_exit
      _
    %238 = vsyncpa [#allocation3], 1
    %s239 = scalar_lea.sflag [#allocation3], 1
    %240 = vsyncpa %s239, 1

</llo_original>
